<compile_context>
chip_gen: v6e
topology: v6e:2x2x1
jax: 0.10.0
libtpu: 0.0.40
codegen_flags: <defaults>
</compile_context>

<pallas_src>
import jax
import jax.numpy as jnp
from jax.experimental import pallas as pl
from jax.experimental.pallas import tpu as pltpu

IN_N, L1_N, L2_N, L3_N, OUT_N = 21, 64, 128, 64, 1
PAD = 128            # common padded feature width (lane-dense everywhere)
BN_EPS = 1e-5


# ----------------------------------------------------------------------------
# Kernel: 4 back-to-back 128x128 matmuls on a (tb, 128) activation tile.
# ----------------------------------------------------------------------------
def mlp_kernel(x_ref, w_ref, b_ref, o_ref):
    bias = b_ref[...]                      # (4, 128), tiny

    h = x_ref[...]                         # (tb, 128)
    h = jnp.maximum(
        jnp.dot(h, w_ref[0], preferred_element_type=jnp.float32)
        + bias[0][None, :], 0.0)
    h = jnp.maximum(
        jnp.dot(h, w_ref[1], preferred_element_type=jnp.float32)
        + bias[1][None, :], 0.0)
    h = jnp.maximum(
        jnp.dot(h, w_ref[2], preferred_element_type=jnp.float32)
        + bias[2][None, :], 0.0)
    o_ref[...] = (jnp.dot(h, w_ref[3], preferred_element_type=jnp.float32)
                  + bias[3][None, :])      # only column 0 is meaningful


# ----------------------------------------------------------------------------
# Parameter prep: BN folding + zero-padding + stacking (done once, outside).
# ----------------------------------------------------------------------------
def _fold_bn(w, b, gamma, beta, mean, var):
    scale = gamma * jax.lax.rsqrt(var + BN_EPS)        # (1, N)
    return w * scale, (b - mean) * scale + beta


def _pad2d(a, rows, cols):
    r, c = a.shape
    return jnp.pad(a, ((0, rows - r), (0, cols - c)))


def pack_params(params):
    (w1, b1, g1, be1, rm1, rv1,
     w2, b2, g2, be2, rm2, rv2,
     w3, b3, g3, be3, rm3, rv3,
     w4, b4) = params

    w1f, b1f = _fold_bn(w1, b1, g1, be1, rm1, rv1)
    w2f, b2f = _fold_bn(w2, b2, g2, be2, rm2, rv2)
    w3f, b3f = _fold_bn(w3, b3, g3, be3, rm3, rv3)

    W = jnp.stack([_pad2d(w1f, PAD, PAD),
                   _pad2d(w2f, PAD, PAD),
                   _pad2d(w3f, PAD, PAD),
                   _pad2d(w4, PAD, PAD)], axis=0)       # (4, 128, 128)
    Bv = jnp.concatenate([_pad2d(b1f, 1, PAD),
                          _pad2d(b2f, 1, PAD),
                          _pad2d(b3f, 1, PAD),
                          _pad2d(b4, 1, PAD)], axis=0)  # (4, 128)
    return W, Bv


# ----------------------------------------------------------------------------
# Wrapper
# ----------------------------------------------------------------------------
def _round_up(x, m):
    return ((x + m - 1) // m) * m


def try3_forward(x, params, *, tb=None):
    B, F = x.shape
    assert F == IN_N

    W, Bv = pack_params(params)

    if tb is None:
        # Large tiles amortize the ~0.35us/step overhead; keep >=2 grid steps
        # when the batch allows so v7x's 2 TensorCores both get work.
        tb = 512 if B >= 1024 else _round_up(max(8, pl.cdiv(B, 2)), 8)
    B_pad = _round_up(B, tb)

    # Zero-pad batch (remainder rows) and features (21 -> 128) in one shot.
    x_pad = jnp.zeros((B_pad, PAD), jnp.float32).at[:B, :IN_N].set(x)

    out = pl.pallas_call(
        mlp_kernel,
        out_shape=jax.ShapeDtypeStruct((B_pad, PAD), jnp.float32),
        grid=(B_pad // tb,),
        in_specs=[
            pl.BlockSpec((tb, PAD), lambda i: (i, 0)),        # activations
            pl.BlockSpec((4, PAD, PAD), lambda i: (0, 0, 0)),  # stacked weights
            pl.BlockSpec((4, PAD), lambda i: (0, 0)),          # stacked biases
        ],
        out_specs=pl.BlockSpec((tb, PAD), lambda i: (i, 0)),
        compiler_params=pltpu.CompilerParams(
            dimension_semantics=("parallel",)),
    )(x_pad, W, Bv)

    return out[:B, :OUT_N]


# ----------------------------------------------------------------------------
# PyTorch-style init + pure-JAX reference (unfolded, unpadded)
# ----------------------------------------------------------------------------
def init_params(key):
    def linear(k, fan_in, fan_out):
        kw, kb = jax.random.split(k)
        bound = 1.0 / (fan_in ** 0.5)
        w = jax.random.uniform(kw, (fan_in, fan_out), jnp.float32, -bound, bound)
        b = jax.random.uniform(kb, (1, fan_out), jnp.float32, -bound, bound)
        return w, b

    def bn(n):
        return (jnp.ones((1, n), jnp.float32),    # gamma
                jnp.zeros((1, n), jnp.float32),   # beta
                jnp.zeros((1, n), jnp.float32),   # running_mean
                jnp.ones((1, n), jnp.float32))    # running_var

    k1, k2, k3, k4 = jax.random.split(key, 4)
    w1, b1 = linear(k1, IN_N, L1_N)
    w2, b2 = linear(k2, L1_N, L2_N)
    w3, b3 = linear(k3, L2_N, L3_N)
    w4, b4 = linear(k4, L3_N, OUT_N)
    g1, be1, rm1, rv1 = bn(L1_N)
    g2, be2, rm2, rv2 = bn(L2_N)
    g3, be3, rm3, rv3 = bn(L3_N)
    return (w1, b1, g1, be1, rm1, rv1,
            w2, b2, g2, be2, rm2, rv2,
            w3, b3, g3, be3, rm3, rv3,
            w4, b4)


def try3_reference(x, params):
    (w1, b1, g1, be1, rm1, rv1,
     w2, b2, g2, be2, rm2, rv2,
     w3, b3, g3, be3, rm3, rv3,
     w4, b4) = params
    h = x @ w1 + b1
    h = jnp.maximum((h - rm1) * jax.lax.rsqrt(rv1 + BN_EPS) * g1 + be1, 0.0)
    h = h @ w2 + b2
    h = jnp.maximum((h - rm2) * jax.lax.rsqrt(rv2 + BN_EPS) * g2 + be2, 0.0)
    h = h @ w3 + b3
    h = jnp.maximum((h - rm3) * jax.lax.rsqrt(rv3 + BN_EPS) * g3 + be3, 0.0)
    return h @ w4 + b4


if __name__ == "__main__":
    key = jax.random.PRNGKey(0)
    kx, kp = jax.random.split(key)

    B = 16  # small demo batch; module input width is in_n = 21
    x = jax.random.normal(kx, (B, IN_N), dtype=jnp.float32)
    params = init_params(kp)

    out = try3_forward(x, params)          # auto tb -> 8 here (2 grid steps)
    out = jax.block_until_ready(out)

    ref = try3_reference(x, params)
    assert out.shape == (B, OUT_N)
    assert bool(jnp.allclose(out, ref, atol=1e-4, rtol=1e-4)), "mismatch vs reference"

    print("KERNEL_OK")
</pallas_src>

<mosaic_0001>
module attributes {stable_mosaic.version = 11 : i64} {
  func.func @mlp_kernel(%arg0: i32, %arg1: memref<8x128xf32, #tpu.memory_space<vmem>>, %arg2: memref<4x128x128xf32, #tpu.memory_space<vmem>>, %arg3: memref<4x128xf32, #tpu.memory_space<vmem>>, %arg4: memref<8x128xf32, #tpu.memory_space<vmem>>) attributes {dimension_semantics = [#tpu.dimension_semantics<parallel>], iteration_bounds = array<i64: 2>, scalar_prefetch = 0 : i64, scratch_operands = 0 : i64, tpu.core_type = #tpu.core_type<tc>, window_params = [{transform_indices = @transform_0, window_bounds = array<i64: 8, 128>}, {pipeline_mode = #tpu.pipeline_mode<synchronous>, transform_indices = @transform_1, window_bounds = array<i64: 4, 128, 128>}, {pipeline_mode = #tpu.pipeline_mode<synchronous>, transform_indices = @transform_2, window_bounds = array<i64: 4, 128>}, {transform_indices = @transform_3, window_bounds = array<i64: 8, 128>}]} {
    %c0 = arith.constant 0 : index
    %c0_0 = arith.constant 0 : index
    %0 = vector.load %arg3[%c0, %c0_0] : memref<4x128xf32, #tpu.memory_space<vmem>>, vector<4x128xf32>
    %c0_1 = arith.constant 0 : index
    %c0_2 = arith.constant 0 : index
    %1 = vector.load %arg1[%c0_1, %c0_2] : memref<8x128xf32, #tpu.memory_space<vmem>>, vector<8x128xf32>
    %c0_3 = arith.constant 0 : index
    %c0_4 = arith.constant 0 : index
    %c0_5 = arith.constant 0 : index
    %2 = vector.load %arg2[%c0_3, %c0_4, %c0_5] : memref<4x128x128xf32, #tpu.memory_space<vmem>>, vector<1x128x128xf32>
    %3 = vector.shape_cast %2 : vector<1x128x128xf32> to vector<128x128xf32>
    %cst = arith.constant dense<0.000000e+00> : vector<8x128xf32>
    %4 = tpu.matmul %1, %3, %cst {dimension_numbers = #tpu.dot_dimension_numbers<[1], [0], [0], [1], [0, 0, 1, 1], [], []>} : vector<8x128xf32>, vector<128x128xf32>, vector<8x128xf32> -> vector<8x128xf32>
    %5 = vector.extract_strided_slice %0 {offsets = [0, 0], sizes = [1, 128], strides = [1, 1]} : vector<4x128xf32> to vector<1x128xf32>
    %6 = vector.shape_cast %5 : vector<1x128xf32> to vector<128xf32>
    %7 = vector.shape_cast %6 : vector<128xf32> to vector<1x128xf32>
    %8 = vector.broadcast %7 : vector<1x128xf32> to vector<8x128xf32>
    %9 = arith.addf %4, %8 : vector<8x128xf32>
    %cst_6 = arith.constant 0.000000e+00 : f32
    %10 = vector.broadcast %cst_6 : f32 to vector<8x128xf32>
    %11 = arith.maximumf %9, %10 : vector<8x128xf32>
    %c1 = arith.constant 1 : index
    %c0_7 = arith.constant 0 : index
    %c0_8 = arith.constant 0 : index
    %12 = vector.load %arg2[%c1, %c0_7, %c0_8] : memref<4x128x128xf32, #tpu.memory_space<vmem>>, vector<1x128x128xf32>
    %13 = vector.shape_cast %12 : vector<1x128x128xf32> to vector<128x128xf32>
    %cst_9 = arith.constant dense<0.000000e+00> : vector<8x128xf32>
    %14 = tpu.matmul %11, %13, %cst_9 {dimension_numbers = #tpu.dot_dimension_numbers<[1], [0], [0], [1], [0, 0, 1, 1], [], []>} : vector<8x128xf32>, vector<128x128xf32>, vector<8x128xf32> -> vector<8x128xf32>
    %15 = vector.extract_strided_slice %0 {offsets = [1, 0], sizes = [1, 128], strides = [1, 1]} : vector<4x128xf32> to vector<1x128xf32>
    %16 = vector.shape_cast %15 : vector<1x128xf32> to vector<128xf32>
    %17 = vector.shape_cast %16 : vector<128xf32> to vector<1x128xf32>
    %18 = vector.broadcast %17 : vector<1x128xf32> to vector<8x128xf32>
    %19 = arith.addf %14, %18 : vector<8x128xf32>
    %cst_10 = arith.constant 0.000000e+00 : f32
    %20 = vector.broadcast %cst_10 : f32 to vector<8x128xf32>
    %21 = arith.maximumf %19, %20 : vector<8x128xf32>
    %c2 = arith.constant 2 : index
    %c0_11 = arith.constant 0 : index
    %c0_12 = arith.constant 0 : index
    %22 = vector.load %arg2[%c2, %c0_11, %c0_12] : memref<4x128x128xf32, #tpu.memory_space<vmem>>, vector<1x128x128xf32>
    %23 = vector.shape_cast %22 : vector<1x128x128xf32> to vector<128x128xf32>
    %cst_13 = arith.constant dense<0.000000e+00> : vector<8x128xf32>
    %24 = tpu.matmul %21, %23, %cst_13 {dimension_numbers = #tpu.dot_dimension_numbers<[1], [0], [0], [1], [0, 0, 1, 1], [], []>} : vector<8x128xf32>, vector<128x128xf32>, vector<8x128xf32> -> vector<8x128xf32>
    %25 = vector.extract_strided_slice %0 {offsets = [2, 0], sizes = [1, 128], strides = [1, 1]} : vector<4x128xf32> to vector<1x128xf32>
    %26 = vector.shape_cast %25 : vector<1x128xf32> to vector<128xf32>
    %27 = vector.shape_cast %26 : vector<128xf32> to vector<1x128xf32>
    %28 = vector.broadcast %27 : vector<1x128xf32> to vector<8x128xf32>
    %29 = arith.addf %24, %28 : vector<8x128xf32>
    %cst_14 = arith.constant 0.000000e+00 : f32
    %30 = vector.broadcast %cst_14 : f32 to vector<8x128xf32>
    %31 = arith.maximumf %29, %30 : vector<8x128xf32>
    %c3 = arith.constant 3 : index
    %c0_15 = arith.constant 0 : index
    %c0_16 = arith.constant 0 : index
    %32 = vector.load %arg2[%c3, %c0_15, %c0_16] : memref<4x128x128xf32, #tpu.memory_space<vmem>>, vector<1x128x128xf32>
    %33 = vector.shape_cast %32 : vector<1x128x128xf32> to vector<128x128xf32>
    %cst_17 = arith.constant dense<0.000000e+00> : vector<8x128xf32>
    %34 = tpu.matmul %31, %33, %cst_17 {dimension_numbers = #tpu.dot_dimension_numbers<[1], [0], [0], [1], [0, 0, 1, 1], [], []>} : vector<8x128xf32>, vector<128x128xf32>, vector<8x128xf32> -> vector<8x128xf32>
    %35 = vector.extract_strided_slice %0 {offsets = [3, 0], sizes = [1, 128], strides = [1, 1]} : vector<4x128xf32> to vector<1x128xf32>
    %36 = vector.shape_cast %35 : vector<1x128xf32> to vector<128xf32>
    %37 = vector.shape_cast %36 : vector<128xf32> to vector<1x128xf32>
    %38 = vector.broadcast %37 : vector<1x128xf32> to vector<8x128xf32>
    %39 = arith.addf %34, %38 : vector<8x128xf32>
    %c0_18 = arith.constant 0 : index
    %c0_19 = arith.constant 0 : index
    %40 = vector.load %arg4[%c0_18, %c0_19] : memref<8x128xf32, #tpu.memory_space<vmem>>, vector<8x128xf32>
    tpu.vector_store %arg4[%c0_18, %c0_19], %39 {strides = array<i32>} : memref<8x128xf32, #tpu.memory_space<vmem>>, vector<8x128xf32>,
    return
  }
  func.func @transform_0(%arg0: i32) -> (i32, i32) {
    %c0_i32 = arith.constant 0 : i32
    %c0_i32_0 = arith.constant 0 : i32
    return %arg0, %c0_i32 : i32, i32
  }
  func.func @transform_1(%arg0: i32) -> (i32, i32, i32) {
    %c0_i32 = arith.constant 0 : i32
    %c0_i32_0 = arith.constant 0 : i32
    %c0_i32_1 = arith.constant 0 : i32
    %c0_i32_2 = arith.constant 0 : i32
    return %c0_i32, %c0_i32_0, %c0_i32_1 : i32, i32, i32
  }
  func.func @transform_2(%arg0: i32) -> (i32, i32) {
    %c0_i32 = arith.constant 0 : i32
    %c0_i32_0 = arith.constant 0 : i32
    %c0_i32_1 = arith.constant 0 : i32
    return %c0_i32, %c0_i32_0 : i32, i32
  }
  func.func @transform_3(%arg0: i32) -> (i32, i32) {
    %c0_i32 = arith.constant 0 : i32
    %c0_i32_0 = arith.constant 0 : i32
    return %arg0, %c0_i32 : i32, i32
  }
}

</mosaic_0001>

<llo_original>
// kernel: tpu_custom_call.1
$region0: #{tpu_custom_call.1}
  #allocation0 [shape = 'u32[]', space=smem, size = 0x4, offset = 0x4, fixed_abs, tag = 'smem constant byte address 0x4 - core index']
  #allocation1 [shape = 'u32[144,128]{1,0:T(1,128)}', space=vmem, size = 0x12000, scoped, tag = 'internal scratch']
  %s0 = inlined_call_operand.hbm [shape: f32[16,128], index: 0, kind: input, shape index: {}]
  %s1 = inlined_call_operand.hbm [shape: f32[4,128,128], index: 1, kind: input, shape index: {}]
  %s2 = inlined_call_operand.hbm [shape: f32[4,128], index: 2, kind: input, shape index: {}]
  %s3 = inlined_call_operand.hbm [shape: f32[16,128], index: 3, kind: output, shape index: {}]
  %s4 = sld [smem:[#allocation0]]
  $region57: #{tpu_custom_call.1} parent=0
    _
  %s6 = ssub.s32 1, %s4
  %s7 = scalar_select 0, %s6, %s4
  $region1: #{tpu_custom_call.1} parent=0
    #allocation2 [shape = 'u8[8192]{0}', space=vmem, size = 0x2000, scoped, tag = 'input window, operand 0']
    #allocation3 [shape = 's32[2]{0}', space=sflag, size = 0x8, scoped, tag = 'scoped memory for tpu_custom_call.1']
    #allocation4 [shape = 's32[2]{0}', space=sflag, size = 0x8, scoped, tag = 'scoped memory for tpu_custom_call.1']
    #allocation5 [shape = 'u8[262144]{0}', space=vmem, size = 0x40000, scoped, tag = 'input window, operand 1, single buffered']
    #allocation6 [shape = 's32[1]{0}', space=sflag, size = 0x4, scoped, tag = 'scoped memory for tpu_custom_call.1']
    #allocation7 [shape = 'u8[2048]{0}', space=vmem, size = 0x800, scoped, tag = 'input window, operand 2, single buffered']
    #allocation8 [shape = 'u8[8192]{0}', space=vmem, size = 0x2000, scoped, tag = 'output window, operand 0']
    %8 = vsyncpa [#allocation3], 0
    %s9 = scalar_lea.sflag [#allocation3], 1
    %10 = vsyncpa %s9, 0
    %11 = vsyncpa [#allocation6], 0
    %12 = vsyncpa [#allocation4], 0
    %s13 = scalar_lea.sflag [#allocation4], 1
    %14 = vsyncpa %s13, 0
    loop: start=0, step=1, limit=4
    $region2: #{tpu_custom_call.1} parent=1 // loop_pre_header
      _
    $region3: #{tpu_custom_call.1} parent=1 // loop_header
      %s16 = sphi 0, %s20
      %p17 = scmp.ge.s32.totalorder %s16, 4
      %s26 = sphi 0, %s28
      %s29 = sphi 0, %s26
      %s30 = sphi 0, %s29
      %s46 = sphi 0, %s30
      %s50 = sphi 0, %s50
      %s52 = sphi 0, %s50
      %s53 = sphi 0, %s52
      %s67 = sphi 0, %s53
      %s71 = sphi 0, %s71
      %s73 = sphi 0, %s71
      %s74 = sphi 0, %s73
      %s88 = sphi 0, %s74
      %s94 = sphi 0, %s96
      %s97 = sphi 0, %s94
      %s98 = sphi 0, %s97
      %s114 = sphi 0, %s98
    $region4: #{tpu_custom_call.1} parent=1 // loop_header_branch
      %19 = sbr.rel (%p17) target = $region8
    $region5: #{tpu_custom_call.1} parent=1 // loop_body
      %s21 = ssub.s32 %s16, 1
      %s22 = ssub.s32 %s16, 2
      %s23 = sadd.s32 %s16, 1
      %s24 = ssub.s32 %s16, %s23
      %p25 = scmp.eq.s32.totalorder %s24, 0
      %s27 = sadd.s32 %s26, 1
      %s28 = scalar_select %p25, %s26, %s27
      %p31 = pneg %p25
      %p32 = scmp.eq.s32.totalorder %s16, 1
      %p33 = por %p31, %p32
      %p34 = scmp.ne.s32.totalorder %s26, %s29
      %p35 = scmp.eq.s32.totalorder %s16, 0
      %p36 = por %p34, %p35
      %p37 = scmp.ne.s32.totalorder %s26, %s29
      %p38 = scmp.eq.s32.totalorder %s21, 1
      %p39 = por %p37, %p38
      %p40 = scmp.ne.s32.totalorder %s29, %s30
      %p41 = scmp.eq.s32.totalorder %s21, 0
      %p42 = por %p40, %p41
      %p43 = scmp.ne.s32.totalorder %s29, %s30
      %p44 = scmp.eq.s32.totalorder %s22, 1
      %p45 = por %p43, %p44
      %p47 = scmp.ne.s32.totalorder %s30, %s46
      %p48 = scmp.eq.s32.totalorder %s22, 0
      %p49 = por %p47, %p48
      %s51 = sadd.s32 %s50, 1
      %p54 = scmp.eq.s32.totalorder %s16, 1
      %p55 = scmp.ne.s32.totalorder %s50, %s52
      %p56 = scmp.eq.s32.totalorder %s16, 0
      %p57 = por %p55, %p56
      %p58 = scmp.ne.s32.totalorder %s50, %s52
      %p59 = scmp.eq.s32.totalorder %s21, 1
      %p60 = por %p58, %p59
      %p61 = scmp.ne.s32.totalorder %s52, %s53
      %p62 = scmp.eq.s32.totalorder %s21, 0
      %p63 = por %p61, %p62
      %p64 = scmp.ne.s32.totalorder %s52, %s53
      %p65 = scmp.eq.s32.totalorder %s22, 1
      %p66 = por %p64, %p65
      %p68 = scmp.ne.s32.totalorder %s53, %s67
      %p69 = scmp.eq.s32.totalorder %s22, 0
      %p70 = por %p68, %p69
      %s72 = sadd.s32 %s71, 1
      %p75 = scmp.eq.s32.totalorder %s16, 1
      %p76 = scmp.ne.s32.totalorder %s71, %s73
      %p77 = scmp.eq.s32.totalorder %s16, 0
      %p78 = por %p76, %p77
      %p79 = scmp.ne.s32.totalorder %s71, %s73
      %p80 = scmp.eq.s32.totalorder %s21, 1
      %p81 = por %p79, %p80
      %p82 = scmp.ne.s32.totalorder %s73, %s74
      %p83 = scmp.eq.s32.totalorder %s21, 0
      %p84 = por %p82, %p83
      %p85 = scmp.ne.s32.totalorder %s73, %s74
      %p86 = scmp.eq.s32.totalorder %s22, 1
      %p87 = por %p85, %p86
      %p89 = scmp.ne.s32.totalorder %s74, %s88
      %p90 = scmp.eq.s32.totalorder %s22, 0
      %p91 = por %p89, %p90
      %s92 = ssub.s32 %s16, %s23
      %p93 = scmp.eq.s32.totalorder %s92, 0
      %s95 = sadd.s32 %s94, 1
      %s96 = scalar_select %p93, %s94, %s95
      %p99 = pneg %p93
      %p100 = scmp.eq.s32.totalorder %s16, 1
      %p101 = por %p99, %p100
      %p102 = scmp.ne.s32.totalorder %s94, %s97
      %p103 = scmp.eq.s32.totalorder %s16, 0
      %p104 = por %p102, %p103
      %p105 = scmp.ne.s32.totalorder %s94, %s97
      %p106 = scmp.eq.s32.totalorder %s21, 1
      %p107 = por %p105, %p106
      %p108 = scmp.ne.s32.totalorder %s97, %s98
      %p109 = scmp.eq.s32.totalorder %s21, 0
      %p110 = por %p108, %p109
      %p111 = scmp.ne.s32.totalorder %s97, %s98
      %p112 = scmp.eq.s32.totalorder %s22, 1
      %p113 = por %p111, %p112
      %p115 = scmp.ne.s32.totalorder %s98, %s114
      %p116 = scmp.eq.s32.totalorder %s22, 0
      %p117 = por %p115, %p116
      %p118 = scmp.le.s32.totalorder 1, %s16
      %p119 = scmp.lt.s32.totalorder %s16, 3
      %p120 = pnand %p118, %p119
      %p121 = pneg %p120
      // Predicated region
      $region9: #{tpu_custom_call.1} parent=5 // pred_check
        _
      $region10: #{tpu_custom_call.1} parent=5 // pred_check_branch
        %123 = sbr.rel (%p120) target = $region12
      $region11: #{tpu_custom_call.1} parent=5 // pred_region
        %s124 = ssub.s32 %s16, 1
        // Predicated region
        $region13: #{tpu_custom_call.1} parent=11 // pred_check
          %p125 = pneg %p63
        $region14: #{tpu_custom_call.1} parent=11 // pred_check_branch
          %127 = sbr.rel (%p125) target = $region16
        $region15: #{tpu_custom_call.1} parent=11 // pred_region
          %s129 = ssub.s32 8192, 8192
          %130 = vsyncadd [#allocation6], %s129
          %s131 = sshll.u32 [#allocation5], 4
          %s132 = int_to_ptr.vmem [resolvable:$true] %s131
          %137 = dma.hbm_to_vmem [thread:$0]  %s1, 8192, %s132, [#allocation6], 128, 128, 8
        $region16: #{tpu_custom_call.1} parent=11 // pred_fallthru
          _
        // Predicated region
        $region17: #{tpu_custom_call.1} parent=11 // pred_check
          %p138 = pneg %p84
        $region18: #{tpu_custom_call.1} parent=11 // pred_check_branch
          %140 = sbr.rel (%p138) target = $region20
        $region19: #{tpu_custom_call.1} parent=11 // pred_region
          %s142 = ssub.s32 64, 64
          %143 = vsyncadd [#allocation6], %s142
          %s145 = sshll.u32 [#allocation7], 4
          %s146 = int_to_ptr.vmem [resolvable:$true] %s145
          %148 = dma.hbm_to_vmem [thread:$0]  %s2, 64, %s146, [#allocation6]
        $region20: #{tpu_custom_call.1} parent=11 // pred_fallthru
          _
      $region12: #{tpu_custom_call.1} parent=5 // pred_fallthru
        _
      %p149 = scmp.lt.s32.totalorder %s16, 2
      // Predicated region
      $region21: #{tpu_custom_call.1} parent=5 // pred_check
        %p150 = pneg %p149
      $region22: #{tpu_custom_call.1} parent=5 // pred_check_branch
        %152 = sbr.rel (%p150) target = $region24
      $region23: #{tpu_custom_call.1} parent=5 // pred_region
        // Predicated region
        $region25: #{tpu_custom_call.1} parent=23 // pred_check
          %p153 = pneg %p36
        $region26: #{tpu_custom_call.1} parent=23 // pred_check_branch
          %155 = sbr.rel (%p153) target = $region28
        $region27: #{tpu_custom_call.1} parent=23 // pred_region
          %s156 = sand.u32 %s26, 1
          %s157 = scalar_lea.sflag [#allocation3], %s156
          %s158 = sand.u32 %s26, 1
          %s159 = smul.addr %s158, 8
          %s160 = scalar_lea.vmem [#allocation2], %s159
          %s162 = ssub.s32 128, 128
          %163 = vsyncadd %s157, %s162
          %s164 = smul.addr %s16, 128
          %s165 = scalar_lea.hbm %s0, %s164
          %s167 = sshll.u32 %s160, 4
          %s168 = int_to_ptr.vmem [resolvable:$true] %s167
          %170 = dma.hbm_to_vmem [thread:$0]  %s165, 128, %s168, %s157
        $region28: #{tpu_custom_call.1} parent=23 // pred_fallthru
          _
      $region24: #{tpu_custom_call.1} parent=5 // pred_fallthru
        _
      %p171 = scmp.le.s32.totalorder 1, %s16
      %p172 = scmp.lt.s32.totalorder %s16, 3
      %p173 = pnand %p171, %p172
      %p174 = pneg %p173
      // Predicated region
      $region29: #{tpu_custom_call.1} parent=5 // pred_check
        _
      $region30: #{tpu_custom_call.1} parent=5 // pred_check_branch
        %176 = sbr.rel (%p173) target = $region32
      $region31: #{tpu_custom_call.1} parent=5 // pred_region
        %s177 = ssub.s32 %s16, 1
        %s178 = sand.u32 %s29, 1
        %s179 = scalar_lea.sflag [#allocation3], %s178
        %s180 = sand.u32 %s29, 1
        %s181 = smul.addr %s180, 8
        %s182 = scalar_lea.vmem [#allocation2], %s181
        // Predicated region
        $region33: #{tpu_custom_call.1} parent=31 // pred_check
          %p183 = pneg %p42
        $region34: #{tpu_custom_call.1} parent=31 // pred_check_branch
          %185 = sbr.rel (%p183) target = $region36
        $region35: #{tpu_custom_call.1} parent=31 // pred_region
          %186 = dma.done %s179, 128
        $region36: #{tpu_custom_call.1} parent=31 // pred_fallthru
          _
        // Predicated region
        $region37: #{tpu_custom_call.1} parent=31 // pred_check
          %p187 = pneg %p63
        $region38: #{tpu_custom_call.1} parent=31 // pred_check_branch
          %189 = sbr.rel (%p187) target = $region40
        $region39: #{tpu_custom_call.1} parent=31 // pred_region
          %190 = dma.done [#allocation6], 8192
        $region40: #{tpu_custom_call.1} parent=31 // pred_fallthru
          _
        // Predicated region
        $region41: #{tpu_custom_call.1} parent=31 // pred_check
          %p191 = pneg %p84
        $region42: #{tpu_custom_call.1} parent=31 // pred_check_branch
          %193 = sbr.rel (%p191) target = $region44
        $region43: #{tpu_custom_call.1} parent=31 // pred_region
          %194 = dma.done [#allocation6], 64
        $region44: #{tpu_custom_call.1} parent=31 // pred_fallthru
          _
        %s195 = sand.u32 %s29, 1
        %s196 = scalar_lea.sflag [#allocation3], %s195
        %s197 = sand.u32 %s29, 1
        %s198 = smul.addr %s197, 8
        %s199 = scalar_lea.vmem [#allocation2], %s198
        %p200 = pneg %p42
        %p201 = pneg %p39
        %p202 = pneg %p63
        %p203 = pneg %p60
        %p204 = pneg %p84
        %p205 = pneg %p81
        %p206 = pneg %p110
        %p207 = pneg %p107
        %s208 = sand.u32 %s97, 1
        %s209 = scalar_lea.sflag [#allocation4], %s208
        %s210 = sand.u32 %s97, 1
        %s211 = smul.addr %s210, 8
        %s212 = scalar_lea.vmem [#allocation8], %s211
        %v213 = vld [vmem:[#allocation7] sm:$0xf]
        %v214 = vld [vmem:[%s182] sm:$0xff]
        %v215 = vld [vmem:[#allocation5] sm:$0xff]
        %v216 = vld [vmem:[#allocation5 + $0x8] sm:$0xff]
        %v217 = vld [vmem:[#allocation5 + $0x10] sm:$0xff]
        %v218 = vld [vmem:[#allocation5 + $0x18] sm:$0xff]
        %v219 = vld [vmem:[#allocation5 + $0x20] sm:$0xff]
        %v220 = vld [vmem:[#allocation5 + $0x28] sm:$0xff]
        %v221 = vld [vmem:[#allocation5 + $0x30] sm:$0xff]
        %v222 = vld [vmem:[#allocation5 + $0x38] sm:$0xff]
        %v223 = vld [vmem:[#allocation5 + $0x40] sm:$0xff]
        %v224 = vld [vmem:[#allocation5 + $0x48] sm:$0xff]
        %v225 = vld [vmem:[#allocation5 + $0x50] sm:$0xff]
        %v226 = vld [vmem:[#allocation5 + $0x58] sm:$0xff]
        %v227 = vld [vmem:[#allocation5 + $0x60] sm:$0xff]
        %v228 = vld [vmem:[#allocation5 + $0x68] sm:$0xff]
        %v229 = vld [vmem:[#allocation5 + $0x70] sm:$0xff]
        %v230 = vld [vmem:[#allocation5 + $0x78] sm:$0xff]
        %v231 = vlaneseq
        %v232 = vshrl.u32 %v231, 7
        %v233 = vsub.s32 0, %v232
        %v234 = vrot.slane %v213, %v233
        %235 = vmatprep.subr.mxu0 0.0
        %236 = vmatpush1.msra.mxu0 %v230
        %237 = vmatprep.subr.mxu0 0.0
        %238 = vmatpush1.msra.mxu0 %v229
        %239 = vmatprep.subr.mxu0 0.0
        %240 = vmatpush1.msra.mxu0 %v228
        %241 = vmatprep.subr.mxu0 0.0
        %242 = vmatpush1.msra.mxu0 %v227
        %243 = vmatprep.subr.mxu0 0.0
        %244 = vmatpush1.msra.mxu0 %v226
        %245 = vmatprep.subr.mxu0 0.0
        %246 = vmatpush1.msra.mxu0 %v225
        %247 = vmatprep.subr.mxu0 0.0
        %248 = vmatpush1.msra.mxu0 %v224
        %249 = vmatprep.subr.mxu0 0.0
        %250 = vmatpush1.msra.mxu0 %v223
        %251 = vmatprep.subr.mxu0 0.0
        %252 = vmatpush1.msra.mxu0 %v222
        %253 = vmatprep.subr.mxu0 0.0
        %254 = vmatpush1.msra.mxu0 %v221
        %255 = vmatprep.subr.mxu0 0.0
        %256 = vmatpush1.msra.mxu0 %v220
        %257 = vmatprep.subr.mxu0 0.0
        %258 = vmatpush1.msra.mxu0 %v219
        %259 = vmatprep.subr.mxu0 0.0
        %260 = vmatpush1.msra.mxu0 %v218
        %261 = vmatprep.subr.mxu0 0.0
        %262 = vmatpush1.msra.mxu0 %v217
        %263 = vmatprep.subr.mxu0 0.0
        %264 = vmatpush1.msra.mxu0 %v216
        %265 = vmatprep.subr.mxu0 0.0
        %266 = vmatpush1.msra.mxu0 %v215
        %267 = vmatprep.subr.mxu0 0.0
        %268 = vmatpush2.msra.mxu0 0.0
        %269 = vmatprep.subr.mxu0 0.0
        %270 = vmatpush2.msra.mxu0 0.0
        %271 = vmatprep.subr.mxu0 0.0
        %272 = vmatpush2.msra.mxu0 0.0
        %273 = vmatprep.subr.mxu0 0.0
        %274 = vmatpush2.msra.mxu0 0.0
        %275 = vmatprep.subr.mxu0 0.0
        %276 = vmatpush2.msra.mxu0 0.0
        %277 = vmatprep.subr.mxu0 0.0
        %278 = vmatpush2.msra.mxu0 0.0
        %279 = vmatprep.subr.mxu0 0.0
        %280 = vmatpush2.msra.mxu0 0.0
        %281 = vmatprep.subr.mxu0 0.0
        %282 = vmatpush2.msra.mxu0 0.0
        %283 = vmatprep.subr.mxu0 0.0
        %284 = vmatpush2.msra.mxu0 0.0
        %285 = vmatprep.subr.mxu0 0.0
        %286 = vmatpush2.msra.mxu0 0.0
        %287 = vmatprep.subr.mxu0 0.0
        %288 = vmatpush2.msra.mxu0 0.0
        %289 = vmatprep.subr.mxu0 0.0
        %290 = vmatpush2.msra.mxu0 0.0
        %291 = vmatprep.subr.mxu0 0.0
        %292 = vmatpush2.msra.mxu0 0.0
        %293 = vmatprep.subr.mxu0 0.0
        %294 = vmatpush2.msra.mxu0 0.0
        %295 = vmatprep.subr.mxu0 0.0
        %296 = vmatpush2.msra.mxu0 0.0
        %297 = vmatprep.subr.mxu0 0.0
        %298 = vmatpush2.msra.mxu0 0.0
        %299 = vmatprep.mubr.f32.mxu0 0.0
        %300 = vmatmul.mubr.f32.gmra.mxu0 %v214
        %v301 = vpop.f32.mrf.mxu0
        %v302 = vadd.f32 %v234, %v301
        %v303 = vpop.f32.mrf.mxu0
        %304 = vdwg.mxu0
        %v305 = vmax.f32 %v302, 0.0
        %s306 = scalar_lea.vmem [#allocation5], 128
        %v307 = vld [vmem:[%s306] sm:$0xff]
        %v308 = vld [vmem:[%s306 + $0x8] sm:$0xff]
        %v309 = vld [vmem:[%s306 + $0x10] sm:$0xff]
        %v310 = vld [vmem:[%s306 + $0x18] sm:$0xff]
        %v311 = vld [vmem:[%s306 + $0x20] sm:$0xff]
        %v312 = vld [vmem:[%s306 + $0x28] sm:$0xff]
        %v313 = vld [vmem:[%s306 + $0x30] sm:$0xff]
        %v314 = vld [vmem:[%s306 + $0x38] sm:$0xff]
        %v315 = vld [vmem:[%s306 + $0x40] sm:$0xff]
        %v316 = vld [vmem:[%s306 + $0x48] sm:$0xff]
        %v317 = vld [vmem:[%s306 + $0x50] sm:$0xff]
        %v318 = vld [vmem:[%s306 + $0x58] sm:$0xff]
        %v319 = vld [vmem:[%s306 + $0x60] sm:$0xff]
        %v320 = vld [vmem:[%s306 + $0x68] sm:$0xff]
        %v321 = vld [vmem:[%s306 + $0x70] sm:$0xff]
        %v322 = vld [vmem:[%s306 + $0x78] sm:$0xff]
        %v323 = vlaneseq
        %v324 = vshrl.u32 %v323, 7
        %v325 = vsub.s32 1, %v324
        %v326 = vrot.slane %v213, %v325
        %327 = vmatprep.subr.mxu0 0.0
        %328 = vmatpush1.msra.mxu0 %v322
        %329 = vmatprep.subr.mxu0 0.0
        %330 = vmatpush1.msra.mxu0 %v321
        %331 = vmatprep.subr.mxu0 0.0
        %332 = vmatpush1.msra.mxu0 %v320
        %333 = vmatprep.subr.mxu0 0.0
        %334 = vmatpush1.msra.mxu0 %v319
        %335 = vmatprep.subr.mxu0 0.0
        %336 = vmatpush1.msra.mxu0 %v318
        %337 = vmatprep.subr.mxu0 0.0
        %338 = vmatpush1.msra.mxu0 %v317
        %339 = vmatprep.subr.mxu0 0.0
        %340 = vmatpush1.msra.mxu0 %v316
        %341 = vmatprep.subr.mxu0 0.0
        %342 = vmatpush1.msra.mxu0 %v315
        %343 = vmatprep.subr.mxu0 0.0
        %344 = vmatpush1.msra.mxu0 %v314
        %345 = vmatprep.subr.mxu0 0.0
        %346 = vmatpush1.msra.mxu0 %v313
        %347 = vmatprep.subr.mxu0 0.0
        %348 = vmatpush1.msra.mxu0 %v312
        %349 = vmatprep.subr.mxu0 0.0
        %350 = vmatpush1.msra.mxu0 %v311
        %351 = vmatprep.subr.mxu0 0.0
        %352 = vmatpush1.msra.mxu0 %v310
        %353 = vmatprep.subr.mxu0 0.0
        %354 = vmatpush1.msra.mxu0 %v309
        %355 = vmatprep.subr.mxu0 0.0
        %356 = vmatpush1.msra.mxu0 %v308
        %357 = vmatprep.subr.mxu0 0.0
        %358 = vmatpush1.msra.mxu0 %v307
        %359 = vmatprep.subr.mxu0 0.0
        %360 = vmatpush2.msra.mxu0 0.0
        %361 = vmatprep.subr.mxu0 0.0
        %362 = vmatpush2.msra.mxu0 0.0
        %363 = vmatprep.subr.mxu0 0.0
        %364 = vmatpush2.msra.mxu0 0.0
        %365 = vmatprep.subr.mxu0 0.0
        %366 = vmatpush2.msra.mxu0 0.0
        %367 = vmatprep.subr.mxu0 0.0
        %368 = vmatpush2.msra.mxu0 0.0
        %369 = vmatprep.subr.mxu0 0.0
        %370 = vmatpush2.msra.mxu0 0.0
        %371 = vmatprep.subr.mxu0 0.0
        %372 = vmatpush2.msra.mxu0 0.0
        %373 = vmatprep.subr.mxu0 0.0
        %374 = vmatpush2.msra.mxu0 0.0
        %375 = vmatprep.subr.mxu0 0.0
        %376 = vmatpush2.msra.mxu0 0.0
        %377 = vmatprep.subr.mxu0 0.0
        %378 = vmatpush2.msra.mxu0 0.0
        %379 = vmatprep.subr.mxu0 0.0
        %380 = vmatpush2.msra.mxu0 0.0
        %381 = vmatprep.subr.mxu0 0.0
        %382 = vmatpush2.msra.mxu0 0.0
        %383 = vmatprep.subr.mxu0 0.0
        %384 = vmatpush2.msra.mxu0 0.0
        %385 = vmatprep.subr.mxu0 0.0
        %386 = vmatpush2.msra.mxu0 0.0
        %387 = vmatprep.subr.mxu0 0.0
        %388 = vmatpush2.msra.mxu0 0.0
        %389 = vmatprep.subr.mxu0 0.0
        %390 = vmatpush2.msra.mxu0 0.0
        %391 = vmatprep.mubr.f32.mxu0 0.0
        %392 = vmatmul.mubr.f32.gmra.mxu0 %v305
        %v393 = vpop.f32.mrf.mxu0
        %v394 = vadd.f32 %v326, %v393
        %v395 = vpop.f32.mrf.mxu0
        %396 = vdwg.mxu0
        %v397 = vmax.f32 %v394, 0.0
        %s398 = scalar_lea.vmem [#allocation5], 256
        %v399 = vld [vmem:[%s398] sm:$0xff]
        %v400 = vld [vmem:[%s398 + $0x8] sm:$0xff]
        %v401 = vld [vmem:[%s398 + $0x10] sm:$0xff]
        %v402 = vld [vmem:[%s398 + $0x18] sm:$0xff]
        %v403 = vld [vmem:[%s398 + $0x20] sm:$0xff]
        %v404 = vld [vmem:[%s398 + $0x28] sm:$0xff]
        %v405 = vld [vmem:[%s398 + $0x30] sm:$0xff]
        %v406 = vld [vmem:[%s398 + $0x38] sm:$0xff]
        %v407 = vld [vmem:[%s398 + $0x40] sm:$0xff]
        %v408 = vld [vmem:[%s398 + $0x48] sm:$0xff]
        %v409 = vld [vmem:[%s398 + $0x50] sm:$0xff]
        %v410 = vld [vmem:[%s398 + $0x58] sm:$0xff]
        %v411 = vld [vmem:[%s398 + $0x60] sm:$0xff]
        %v412 = vld [vmem:[%s398 + $0x68] sm:$0xff]
        %v413 = vld [vmem:[%s398 + $0x70] sm:$0xff]
        %v414 = vld [vmem:[%s398 + $0x78] sm:$0xff]
        %v415 = vlaneseq
        %v416 = vshrl.u32 %v415, 7
        %v417 = vsub.s32 2, %v416
        %v418 = vrot.slane %v213, %v417
        %419 = vmatprep.subr.mxu0 0.0
        %420 = vmatpush1.msra.mxu0 %v414
        %421 = vmatprep.subr.mxu0 0.0
        %422 = vmatpush1.msra.mxu0 %v413
        %423 = vmatprep.subr.mxu0 0.0
        %424 = vmatpush1.msra.mxu0 %v412
        %425 = vmatprep.subr.mxu0 0.0
        %426 = vmatpush1.msra.mxu0 %v411
        %427 = vmatprep.subr.mxu0 0.0
        %428 = vmatpush1.msra.mxu0 %v410
        %429 = vmatprep.subr.mxu0 0.0
        %430 = vmatpush1.msra.mxu0 %v409
        %431 = vmatprep.subr.mxu0 0.0
        %432 = vmatpush1.msra.mxu0 %v408
        %433 = vmatprep.subr.mxu0 0.0
        %434 = vmatpush1.msra.mxu0 %v407
        %435 = vmatprep.subr.mxu0 0.0
        %436 = vmatpush1.msra.mxu0 %v406
        %437 = vmatprep.subr.mxu0 0.0
        %438 = vmatpush1.msra.mxu0 %v405
        %439 = vmatprep.subr.mxu0 0.0
        %440 = vmatpush1.msra.mxu0 %v404
        %441 = vmatprep.subr.mxu0 0.0
        %442 = vmatpush1.msra.mxu0 %v403
        %443 = vmatprep.subr.mxu0 0.0
        %444 = vmatpush1.msra.mxu0 %v402
        %445 = vmatprep.subr.mxu0 0.0
        %446 = vmatpush1.msra.mxu0 %v401
        %447 = vmatprep.subr.mxu0 0.0
        %448 = vmatpush1.msra.mxu0 %v400
        %449 = vmatprep.subr.mxu0 0.0
        %450 = vmatpush1.msra.mxu0 %v399
        %451 = vmatprep.subr.mxu0 0.0
        %452 = vmatpush2.msra.mxu0 0.0
        %453 = vmatprep.subr.mxu0 0.0
        %454 = vmatpush2.msra.mxu0 0.0
        %455 = vmatprep.subr.mxu0 0.0
        %456 = vmatpush2.msra.mxu0 0.0
        %457 = vmatprep.subr.mxu0 0.0
        %458 = vmatpush2.msra.mxu0 0.0
        %459 = vmatprep.subr.mxu0 0.0
        %460 = vmatpush2.msra.mxu0 0.0
        %461 = vmatprep.subr.mxu0 0.0
        %462 = vmatpush2.msra.mxu0 0.0
        %463 = vmatprep.subr.mxu0 0.0
        %464 = vmatpush2.msra.mxu0 0.0
        %465 = vmatprep.subr.mxu0 0.0
        %466 = vmatpush2.msra.mxu0 0.0
        %467 = vmatprep.subr.mxu0 0.0
        %468 = vmatpush2.msra.mxu0 0.0
        %469 = vmatprep.subr.mxu0 0.0
        %470 = vmatpush2.msra.mxu0 0.0
        %471 = vmatprep.subr.mxu0 0.0
        %472 = vmatpush2.msra.mxu0 0.0
        %473 = vmatprep.subr.mxu0 0.0
        %474 = vmatpush2.msra.mxu0 0.0
        %475 = vmatprep.subr.mxu0 0.0
        %476 = vmatpush2.msra.mxu0 0.0
        %477 = vmatprep.subr.mxu0 0.0
        %478 = vmatpush2.msra.mxu0 0.0
        %479 = vmatprep.subr.mxu0 0.0
        %480 = vmatpush2.msra.mxu0 0.0
        %481 = vmatprep.subr.mxu0 0.0
        %482 = vmatpush2.msra.mxu0 0.0
        %483 = vmatprep.mubr.f32.mxu0 0.0
        %484 = vmatmul.mubr.f32.gmra.mxu0 %v397
        %v485 = vpop.f32.mrf.mxu0
        %v486 = vadd.f32 %v418, %v485
        %v487 = vpop.f32.mrf.mxu0
        %488 = vdwg.mxu0
        %v489 = vmax.f32 %v486, 0.0
        %s490 = scalar_lea.vmem [#allocation5], 384
        %v491 = vld [vmem:[%s490] sm:$0xff]
        %v492 = vld [vmem:[%s490 + $0x8] sm:$0xff]
        %v493 = vld [vmem:[%s490 + $0x10] sm:$0xff]
        %v494 = vld [vmem:[%s490 + $0x18] sm:$0xff]
        %v495 = vld [vmem:[%s490 + $0x20] sm:$0xff]
        %v496 = vld [vmem:[%s490 + $0x28] sm:$0xff]
        %v497 = vld [vmem:[%s490 + $0x30] sm:$0xff]
        %v498 = vld [vmem:[%s490 + $0x38] sm:$0xff]
        %v499 = vld [vmem:[%s490 + $0x40] sm:$0xff]
        %v500 = vld [vmem:[%s490 + $0x48] sm:$0xff]
        %v501 = vld [vmem:[%s490 + $0x50] sm:$0xff]
        %v502 = vld [vmem:[%s490 + $0x58] sm:$0xff]
        %v503 = vld [vmem:[%s490 + $0x60] sm:$0xff]
        %v504 = vld [vmem:[%s490 + $0x68] sm:$0xff]
        %v505 = vld [vmem:[%s490 + $0x70] sm:$0xff]
        %v506 = vld [vmem:[%s490 + $0x78] sm:$0xff]
        %v507 = vlaneseq
        %v508 = vshrl.u32 %v507, 7
        %v509 = vsub.s32 3, %v508
        %v510 = vrot.slane %v213, %v509
        %511 = vmatprep.subr.mxu0 0.0
        %512 = vmatpush1.msra.mxu0 %v506
        %513 = vmatprep.subr.mxu0 0.0
        %514 = vmatpush1.msra.mxu0 %v505
        %515 = vmatprep.subr.mxu0 0.0
        %516 = vmatpush1.msra.mxu0 %v504
        %517 = vmatprep.subr.mxu0 0.0
        %518 = vmatpush1.msra.mxu0 %v503
        %519 = vmatprep.subr.mxu0 0.0
        %520 = vmatpush1.msra.mxu0 %v502
        %521 = vmatprep.subr.mxu0 0.0
        %522 = vmatpush1.msra.mxu0 %v501
        %523 = vmatprep.subr.mxu0 0.0
        %524 = vmatpush1.msra.mxu0 %v500
        %525 = vmatprep.subr.mxu0 0.0
        %526 = vmatpush1.msra.mxu0 %v499
        %527 = vmatprep.subr.mxu0 0.0
        %528 = vmatpush1.msra.mxu0 %v498
        %529 = vmatprep.subr.mxu0 0.0
        %530 = vmatpush1.msra.mxu0 %v497
        %531 = vmatprep.subr.mxu0 0.0
        %532 = vmatpush1.msra.mxu0 %v496
        %533 = vmatprep.subr.mxu0 0.0
        %534 = vmatpush1.msra.mxu0 %v495
        %535 = vmatprep.subr.mxu0 0.0
        %536 = vmatpush1.msra.mxu0 %v494
        %537 = vmatprep.subr.mxu0 0.0
        %538 = vmatpush1.msra.mxu0 %v493
        %539 = vmatprep.subr.mxu0 0.0
        %540 = vmatpush1.msra.mxu0 %v492
        %541 = vmatprep.subr.mxu0 0.0
        %542 = vmatpush1.msra.mxu0 %v491
        %543 = vmatprep.subr.mxu0 0.0
        %544 = vmatpush2.msra.mxu0 0.0
        %545 = vmatprep.subr.mxu0 0.0
        %546 = vmatpush2.msra.mxu0 0.0
        %547 = vmatprep.subr.mxu0 0.0
        %548 = vmatpush2.msra.mxu0 0.0
        %549 = vmatprep.subr.mxu0 0.0
        %550 = vmatpush2.msra.mxu0 0.0
        %551 = vmatprep.subr.mxu0 0.0
        %552 = vmatpush2.msra.mxu0 0.0
        %553 = vmatprep.subr.mxu0 0.0
        %554 = vmatpush2.msra.mxu0 0.0
        %555 = vmatprep.subr.mxu0 0.0
        %556 = vmatpush2.msra.mxu0 0.0
        %557 = vmatprep.subr.mxu0 0.0
        %558 = vmatpush2.msra.mxu0 0.0
        %559 = vmatprep.subr.mxu0 0.0
        %560 = vmatpush2.msra.mxu0 0.0
        %561 = vmatprep.subr.mxu0 0.0
        %562 = vmatpush2.msra.mxu0 0.0
        %563 = vmatprep.subr.mxu0 0.0
        %564 = vmatpush2.msra.mxu0 0.0
        %565 = vmatprep.subr.mxu0 0.0
        %566 = vmatpush2.msra.mxu0 0.0
        %567 = vmatprep.subr.mxu0 0.0
        %568 = vmatpush2.msra.mxu0 0.0
        %569 = vmatprep.subr.mxu0 0.0
        %570 = vmatpush2.msra.mxu0 0.0
        %571 = vmatprep.subr.mxu0 0.0
        %572 = vmatpush2.msra.mxu0 0.0
        %573 = vmatprep.subr.mxu0 0.0
        %574 = vmatpush2.msra.mxu0 0.0
        %575 = vmatprep.mubr.f32.mxu0 0.0
        %576 = vmatmul.mubr.f32.gmra.mxu0 %v489
        %v577 = vpop.f32.mrf.mxu0
        %v578 = vadd.f32 %v510, %v577
        %v579 = vpop.f32.mrf.mxu0
        %580 = vdwg.mxu0
        %581 = vst [vmem:[%s212] sm:$0xff] %v578
        %s582 = sand.u32 %s97, 1
        %s583 = scalar_lea.sflag [#allocation4], %s582
        %s584 = sand.u32 %s97, 1
        %s585 = smul.addr %s584, 8
        %s586 = scalar_lea.vmem [#allocation8], %s585
        // Predicated region
        $region45: #{tpu_custom_call.1} parent=31 // pred_check
          %p587 = pneg %p107
        $region46: #{tpu_custom_call.1} parent=31 // pred_check_branch
          %589 = sbr.rel (%p587) target = $region48
        $region47: #{tpu_custom_call.1} parent=31 // pred_region
          %s591 = ssub.s32 128, 128
          %592 = vsyncadd %s583, %s591
          %s593 = smul.addr %s21, 128
          %s594 = scalar_lea.hbm %s3, %s593
          %s596 = sshll.u32 %s586, 4
          %s597 = int_to_ptr.vmem [resolvable:$true] %s596
          %599 = dma.vmem_to_hbm [thread:$0]  %s597, 128, %s594, %s583
        $region48: #{tpu_custom_call.1} parent=31 // pred_fallthru
          _
      $region32: #{tpu_custom_call.1} parent=5 // pred_fallthru
        _
      %p600 = scmp.le.s32.totalorder 2, %s16
      // Predicated region
      $region49: #{tpu_custom_call.1} parent=5 // pred_check
        %p601 = pneg %p600
      $region50: #{tpu_custom_call.1} parent=5 // pred_check_branch
        %603 = sbr.rel (%p601) target = $region52
      $region51: #{tpu_custom_call.1} parent=5 // pred_region
        %s604 = ssub.s32 %s16, 2
        // Predicated region
        $region53: #{tpu_custom_call.1} parent=51 // pred_check
          %p605 = pneg %p113
        $region54: #{tpu_custom_call.1} parent=51 // pred_check_branch
          %607 = sbr.rel (%p605) target = $region56
        $region55: #{tpu_custom_call.1} parent=51 // pred_region
          %s608 = sand.u32 %s98, 1
          %s609 = scalar_lea.sflag [#allocation4], %s608
          %s610 = sand.u32 %s98, 1
          %s611 = smul.addr %s610, 8
          %s612 = scalar_lea.vmem [#allocation8], %s611
          %613 = dma.done %s609, 128
        $region56: #{tpu_custom_call.1} parent=51 // pred_fallthru
          _
      $region52: #{tpu_custom_call.1} parent=5 // pred_fallthru
        _
    $region6: #{tpu_custom_call.1} parent=1 // loop_footer
      %s20 = sadd.s32 1, %s16
    $region7: #{tpu_custom_call.1} parent=1 // loop_footer_branch
      %15 = sbr.rel target = $region3
    $region8: #{tpu_custom_call.1} parent=1 // loop_exit
      _
    %614 = vsyncpa [#allocation3], 1
    %s615 = scalar_lea.sflag [#allocation3], 1
    %616 = vsyncpa %s615, 1
    %617 = vsyncpa [#allocation6], 1
    %618 = vsyncpa [#allocation4], 1
    %s619 = scalar_lea.sflag [#allocation4], 1
    %620 = vsyncpa %s619, 1

</llo_original>
